<compile_context>
chip_gen: v7x
topology: tpu7x:2x2x1
jax: 0.10.0
libtpu: 0.0.40
codegen_flags: <defaults>
</compile_context>

<pallas_src>
import jax
import jax.numpy as jnp
from jax.experimental import pallas as pl
from jax.experimental.pallas import tpu as pltpu


PACK = 8          # samples packed per row: (B, 10) -> (B/8, 80), a free bitcast reshape
MAX_ROWS = 4096   # packed rows per grid step = 32K samples (review #2)


def _mlp_kernel(x_ref, w1_ref, b1_ref, w2_ref, b2_ref, o_ref):
    # x_ref: (TBR, 80) f32 -- 8 samples per row, each sample's 10 features contiguous.
    x = x_ref[...].astype(jnp.bfloat16)                                  # VPU cast, free
    # net1: (TBR, 80) @ (80, 80) block-diag(W1^T) -> (TBR, 80), f32 MXU accumulation
    h = jnp.dot(x, w1_ref[...], preferred_element_type=jnp.float32)
    h = jnp.maximum(h + b1_ref[...], 0.0)                                # bias + ReLU in f32
    # net2: (TBR, 80) @ (80, 40) block-diag(W2^T) -> (TBR, 40)
    o = jnp.dot(h.astype(jnp.bfloat16), w2_ref[...],
                preferred_element_type=jnp.float32)
    o_ref[...] = (o + b2_ref[...]).astype(o_ref.dtype)                   # f32 output


def _round_up(n, m):
    return ((n + m - 1) // m) * m


@jax.jit
def toy_model_forward(x, w1, b1, w2, b2):
    """x: (B, 10) f32; w1: (10, 10); b1: (10,); w2: (5, 10); b2: (5,).
    Returns (B, 5) f32 = net2(relu(net1(x)))."""
    B, d_in = x.shape
    d_hid = w1.shape[0]
    d_out = w2.shape[0]

    # Pad batch only to a multiple of PACK (<=7 rows; zero-copy fast path when aligned).
    B_pad = _round_up(B, PACK)
    if B_pad != B:
        x = jnp.pad(x, ((0, B_pad - B), (0, 0)))   # only non-aligned batches pay a copy
    R = B_pad // PACK

    # Free, layout-preserving reshape: 8 samples per packed row, lane dim = 80.
    x_packed = x.reshape(R, PACK * d_in)

    # Tiny packed weights (built once, VMEM-resident across the whole grid).
    w1e = jnp.kron(jnp.eye(PACK, dtype=w1.dtype), w1.T).astype(jnp.bfloat16)  # (80, 80)
    w2e = jnp.kron(jnp.eye(PACK, dtype=w2.dtype), w2.T).astype(jnp.bfloat16)  # (80, 40)
    b1e = jnp.tile(b1, PACK).reshape(1, PACK * d_hid).astype(jnp.float32)     # (1, 80)
    b2e = jnp.tile(b2, PACK).reshape(1, PACK * d_out).astype(jnp.float32)     # (1, 40)

    # 32K samples per grid step; ragged final block via cdiv (no tile-sized padding).
    TBR = R if R <= MAX_ROWS else MAX_ROWS
    grid = (pl.cdiv(R, TBR),)

    cin, chid, cout = PACK * d_in, PACK * d_hid, PACK * d_out
    cost = pl.CostEstimate(
        flops=2 * R * (cin * chid + chid * cout),
        transcendentals=0,
        bytes_accessed=R * cin * 4 + R * cout * 4
        + (cin * chid + chid * cout) * 2 + (chid + cout) * 4,
    )

    out_packed = pl.pallas_call(
        _mlp_kernel,
        out_shape=jax.ShapeDtypeStruct((R, cout), jnp.float32),
        grid=grid,
        in_specs=[
            pl.BlockSpec((TBR, cin), lambda i: (i, 0)),    # x: contiguous, pipelined
            pl.BlockSpec((cin, chid), lambda i: (0, 0)),   # W1e: resident across steps
            pl.BlockSpec((1, chid), lambda i: (0, 0)),     # b1e
            pl.BlockSpec((chid, cout), lambda i: (0, 0)),  # W2e
            pl.BlockSpec((1, cout), lambda i: (0, 0)),     # b2e
        ],
        out_specs=pl.BlockSpec((TBR, cout), lambda i: (i, 0)),
        compiler_params=pltpu.CompilerParams(
            dimension_semantics=("parallel",),             # megacore-shard batch on v7x
            vmem_limit_bytes=48 * 1024 * 1024),            # explicit scoped-VMEM headroom
        cost_estimate=cost,
    )(x_packed, w1e, b1e, w2e, b2e)

    out = out_packed.reshape(B_pad, d_out)                 # free reshape back to (B_pad, 5)
    return out[:B] if B_pad != B else out


def init_params(key):
    """Deterministic init mimicking nn.Linear defaults: U(-1/sqrt(fan_in), +1/sqrt(fan_in))."""
    k1, k2, k3, k4 = jax.random.split(key, 4)
    bound = 1.0 / jnp.sqrt(10.0)
    w1 = jax.random.uniform(k1, (10, 10), jnp.float32, -bound, bound)  # (out, in)
    b1 = jax.random.uniform(k2, (10,), jnp.float32, -bound, bound)
    w2 = jax.random.uniform(k3, (5, 10), jnp.float32, -bound, bound)   # (out, in)
    b2 = jax.random.uniform(k4, (5,), jnp.float32, -bound, bound)
    return w1, b1, w2, b2


if __name__ == "__main__":
    key = jax.random.PRNGKey(0)
    kx, kp = jax.random.split(key)
    batch = 128
    x = jax.random.normal(kx, (batch, 10), jnp.float32)
    w1, b1, w2, b2 = init_params(kp)

    out = toy_model_forward(x, w1, b1, w2, b2)
    jax.block_until_ready(out)
    assert out.shape == (batch, 5)

    # Tight check: emulate the kernel's bf16-operand / f32-accumulate numerics in plain JAX.
    f32 = jnp.float32
    xb = x.astype(jnp.bfloat16).astype(f32)
    w1b = w1.astype(jnp.bfloat16).astype(f32)
    w2b = w2.astype(jnp.bfloat16).astype(f32)
    h_ref = jnp.maximum(xb @ w1b.T + b1, 0.0)
    ref_bf16 = h_ref.astype(jnp.bfloat16).astype(f32) @ w2b.T + b2
    assert jnp.allclose(out, ref_bf16, atol=1e-2, rtol=1e-2)

    # Loose check against the pure-f32 PyTorch-equivalent forward.
    ref_f32 = jnp.maximum(x @ w1.T + b1, 0.0) @ w2.T + b2
    assert jnp.allclose(out, ref_f32, atol=5e-2, rtol=5e-2)

    print("KERNEL_OK")
</pallas_src>

<mosaic_0001>
module attributes {stable_mosaic.version = 11 : i64} {
  func.func @_mlp_kernel(%arg0: i32, %arg1: memref<16x80xf32, #tpu.memory_space<vmem>>, %arg2: memref<80x80xbf16, #tpu.memory_space<vmem>>, %arg3: memref<1x80xf32, #tpu.memory_space<vmem>>, %arg4: memref<80x40xbf16, #tpu.memory_space<vmem>>, %arg5: memref<1x40xf32, #tpu.memory_space<vmem>>, %arg6: memref<16x40xf32, #tpu.memory_space<vmem>>) attributes {dimension_semantics = [#tpu.dimension_semantics<parallel>], iteration_bounds = array<i64: 1>, scalar_prefetch = 0 : i64, scratch_operands = 0 : i64, tpu.core_type = #tpu.core_type<tc>, window_params = [{transform_indices = @transform_0, window_bounds = array<i64: 16, 80>}, {pipeline_mode = #tpu.pipeline_mode<synchronous>, transform_indices = @transform_1, window_bounds = array<i64: 80, 80>}, {pipeline_mode = #tpu.pipeline_mode<synchronous>, transform_indices = @transform_2, window_bounds = array<i64: 1, 80>}, {pipeline_mode = #tpu.pipeline_mode<synchronous>, transform_indices = @transform_3, window_bounds = array<i64: 80, 40>}, {pipeline_mode = #tpu.pipeline_mode<synchronous>, transform_indices = @transform_4, window_bounds = array<i64: 1, 40>}, {transform_indices = @transform_5, window_bounds = array<i64: 16, 40>}]} {
    %c0 = arith.constant 0 : index
    %c0_0 = arith.constant 0 : index
    %0 = vector.load %arg1[%c0, %c0_0] : memref<16x80xf32, #tpu.memory_space<vmem>>, vector<16x80xf32>
    %1 = arith.truncf %0 : vector<16x80xf32> to vector<16x80xbf16>
    %c0_1 = arith.constant 0 : index
    %c0_2 = arith.constant 0 : index
    %2 = vector.load %arg2[%c0_1, %c0_2] : memref<80x80xbf16, #tpu.memory_space<vmem>>, vector<80x80xbf16>
    %cst = arith.constant dense<0.000000e+00> : vector<16x80xf32>
    %3 = tpu.matmul %1, %2, %cst {dimension_numbers = #tpu.dot_dimension_numbers<[1], [0], [0], [1], [0, 0, 1, 1], [], []>} : vector<16x80xbf16>, vector<80x80xbf16>, vector<16x80xf32> -> vector<16x80xf32>
    %c0_3 = arith.constant 0 : index
    %c0_4 = arith.constant 0 : index
    %4 = vector.load %arg3[%c0_3, %c0_4] : memref<1x80xf32, #tpu.memory_space<vmem>>, vector<1x80xf32>
    %5 = vector.broadcast %4 : vector<1x80xf32> to vector<16x80xf32>
    %6 = arith.addf %3, %5 : vector<16x80xf32>
    %cst_5 = arith.constant 0.000000e+00 : f32
    %7 = vector.broadcast %cst_5 : f32 to vector<16x80xf32>
    %8 = arith.maximumf %6, %7 : vector<16x80xf32>
    %9 = arith.truncf %8 : vector<16x80xf32> to vector<16x80xbf16>
    %c0_6 = arith.constant 0 : index
    %c0_7 = arith.constant 0 : index
    %10 = vector.load %arg4[%c0_6, %c0_7] : memref<80x40xbf16, #tpu.memory_space<vmem>>, vector<80x40xbf16>
    %cst_8 = arith.constant dense<0.000000e+00> : vector<16x40xf32>
    %11 = tpu.matmul %9, %10, %cst_8 {dimension_numbers = #tpu.dot_dimension_numbers<[1], [0], [0], [1], [0, 0, 1, 1], [], []>} : vector<16x80xbf16>, vector<80x40xbf16>, vector<16x40xf32> -> vector<16x40xf32>
    %c0_9 = arith.constant 0 : index
    %c0_10 = arith.constant 0 : index
    %12 = vector.load %arg5[%c0_9, %c0_10] : memref<1x40xf32, #tpu.memory_space<vmem>>, vector<1x40xf32>
    %13 = vector.broadcast %12 : vector<1x40xf32> to vector<16x40xf32>
    %14 = arith.addf %11, %13 : vector<16x40xf32>
    %c0_11 = arith.constant 0 : index
    %c0_12 = arith.constant 0 : index
    %15 = vector.load %arg6[%c0_11, %c0_12] : memref<16x40xf32, #tpu.memory_space<vmem>>, vector<16x40xf32>
    tpu.vector_store %arg6[%c0_11, %c0_12], %14 {strides = array<i32>} : memref<16x40xf32, #tpu.memory_space<vmem>>, vector<16x40xf32>,
    return
  }
  func.func @transform_0(%arg0: i32) -> (i32, i32) {
    %c0_i32 = arith.constant 0 : i32
    %c0_i32_0 = arith.constant 0 : i32
    return %arg0, %c0_i32 : i32, i32
  }
  func.func @transform_1(%arg0: i32) -> (i32, i32) {
    %c0_i32 = arith.constant 0 : i32
    %c0_i32_0 = arith.constant 0 : i32
    %c0_i32_1 = arith.constant 0 : i32
    return %c0_i32, %c0_i32_0 : i32, i32
  }
  func.func @transform_2(%arg0: i32) -> (i32, i32) {
    %c0_i32 = arith.constant 0 : i32
    %c0_i32_0 = arith.constant 0 : i32
    %c0_i32_1 = arith.constant 0 : i32
    return %c0_i32, %c0_i32_0 : i32, i32
  }
  func.func @transform_3(%arg0: i32) -> (i32, i32) {
    %c0_i32 = arith.constant 0 : i32
    %c0_i32_0 = arith.constant 0 : i32
    %c0_i32_1 = arith.constant 0 : i32
    return %c0_i32, %c0_i32_0 : i32, i32
  }
  func.func @transform_4(%arg0: i32) -> (i32, i32) {
    %c0_i32 = arith.constant 0 : i32
    %c0_i32_0 = arith.constant 0 : i32
    %c0_i32_1 = arith.constant 0 : i32
    return %c0_i32, %c0_i32_0 : i32, i32
  }
  func.func @transform_5(%arg0: i32) -> (i32, i32) {
    %c0_i32 = arith.constant 0 : i32
    %c0_i32_0 = arith.constant 0 : i32
    return %arg0, %c0_i32 : i32, i32
  }
}

</mosaic_0001>

<llo_original>
// kernel: tile.13
$region0: #{tile.13}
  #allocation0 [shape = 's32[1]{0}', space=sflag, size = 0x4, scoped, tag = 'scoped memory for tile.13']
  %s0 = inlined_call_operand.vmem [shape: f32[10], index: 0, kind: input, shape index: {}]
  %s1 = inlined_call_operand.vmem [shape: f32[8,10], index: 1, kind: output, shape index: {}]
  // Predicated region
  $region2: #{tile.13} parent=0 // pred_check
    _
  $region3: #{tile.13} parent=0 // pred_check_branch
    %3 = sbr.rel (0) target = $region5
  $region4: #{tile.13} parent=0 // pred_region
    _
  $region5: #{tile.13} parent=0 // pred_fallthru
    _
  %v4 = vld [vmem:[%s0] ss:$0 sm:$0xff]
  %5 = vst [vmem:[%s1] sm:$0xff] %v4

// kernel: tile.14
$region0: #{tile.14}
  %s0 = inlined_call_operand.vmem [shape: f32[8,10], index: 0, kind: input, shape index: {}]
  %s1 = inlined_call_operand.vmem [shape: f32[1,80], index: 1, kind: output, shape index: {}]
  $region1: #{tile.14} parent=0
    #allocation0 [shape = 'u8[4096]{0}', space=vmem, size = 0x1000, scoped, tag = 'scoped mem for output reshape']
    %v2 = vld [vmem:[%s0] sm:$0x1]
    %vm3 = vcmask 80896
    %4 = vst.msk [vmem:[#allocation0] sm:$0x1] %vm3, %v2
    %s5 = scalar_lea.vmem %s0, 7
    %v6 = vld [vmem:[%s5] sm:$0x1]
    %7 = vrot.lane.b32.xlu0 %v6, 70
    %v8 = vpop.permute.xlu0 %7
    %vm9 = vcmask 654896
    %10 = vst.msk [vmem:[#allocation0] sm:$0x1] %vm9, %v8
    %s11 = scalar_lea.vmem %s0, 6
    %v12 = vld [vmem:[%s11] sm:$0x1]
    %13 = vrot.lane.b32.xlu0 %v12, 60
    %v14 = vpop.permute.xlu0 %13
    %vm15 = vcmask 572896
    %16 = vst.msk [vmem:[#allocation0] sm:$0x1] %vm15, %v14
    %s17 = scalar_lea.vmem %s0, 5
    %v18 = vld [vmem:[%s17] sm:$0x1]
    %19 = vrot.lane.b32.xlu0 %v18, 50
    %v20 = vpop.permute.xlu0 %19
    %vm21 = vcmask 490896
    %22 = vst.msk [vmem:[#allocation0] sm:$0x1] %vm21, %v20
    %s23 = scalar_lea.vmem %s0, 4
    %v24 = vld [vmem:[%s23] sm:$0x1]
    %25 = vrot.lane.b32.xlu0 %v24, 40
    %v26 = vpop.permute.xlu0 %25
    %vm27 = vcmask 408896
    %28 = vst.msk [vmem:[#allocation0] sm:$0x1] %vm27, %v26
    %s29 = scalar_lea.vmem %s0, 3
    %v30 = vld [vmem:[%s29] sm:$0x1]
    %31 = vrot.lane.b32.xlu0 %v30, 30
    %v32 = vpop.permute.xlu0 %31
    %vm33 = vcmask 326896
    %34 = vst.msk [vmem:[#allocation0] sm:$0x1] %vm33, %v32
    %s35 = scalar_lea.vmem %s0, 2
    %v36 = vld [vmem:[%s35] sm:$0x1]
    %37 = vrot.lane.b32.xlu0 %v36, 20
    %v38 = vpop.permute.xlu0 %37
    %vm39 = vcmask 244896
    %40 = vst.msk [vmem:[#allocation0] sm:$0x1] %vm39, %v38
    %s41 = scalar_lea.vmem %s0, 1
    %v42 = vld [vmem:[%s41] sm:$0x1]
    %43 = vrot.lane.b32.xlu0 %v42, 10
    %v44 = vpop.permute.xlu0 %43
    %vm45 = vcmask 162896
    %46 = vst.msk [vmem:[#allocation0] sm:$0x1] %vm45, %v44
    %s48 = sshllo.u32 0, 1
    %v50 = vld [vmem:[#allocation0] sm:%s48]
    %s51 = sshllo.u32 0, 1
    %52 = vst [vmem:[%s1] sm:%s51] %v50

// kernel: tile.18
$region0: #{tile.18}
  #allocation0 [shape = 's32[1]{0}', space=sflag, size = 0x4, scoped, tag = 'scoped memory for tile.18']
  %s0 = inlined_call_operand.vmem [shape: f32[5], index: 0, kind: input, shape index: {}]
  %s1 = inlined_call_operand.vmem [shape: f32[8,5], index: 1, kind: output, shape index: {}]
  // Predicated region
  $region2: #{tile.18} parent=0 // pred_check
    _
  $region3: #{tile.18} parent=0 // pred_check_branch
    %3 = sbr.rel (0) target = $region5
  $region4: #{tile.18} parent=0 // pred_region
    _
  $region5: #{tile.18} parent=0 // pred_fallthru
    _
  %v4 = vld [vmem:[%s0] ss:$0 sm:$0xff]
  %5 = vst [vmem:[%s1] sm:$0xff] %v4

// kernel: tile.19
$region0: #{tile.19}
  %s0 = inlined_call_operand.vmem [shape: f32[8,5], index: 0, kind: input, shape index: {}]
  %s1 = inlined_call_operand.vmem [shape: f32[1,40], index: 1, kind: output, shape index: {}]
  $region1: #{tile.19} parent=0
    #allocation0 [shape = 'u8[4096]{0}', space=vmem, size = 0x1000, scoped, tag = 'scoped mem for output reshape']
    %v2 = vld [vmem:[%s0] sm:$0x1]
    %vm3 = vcmask 39936
    %4 = vst.msk [vmem:[#allocation0] sm:$0x1] %vm3, %v2
    %s5 = scalar_lea.vmem %s0, 7
    %v6 = vld [vmem:[%s5] sm:$0x1]
    %7 = vrot.lane.b32.xlu0 %v6, 35
    %v8 = vpop.permute.xlu0 %7
    %vm9 = vcmask 326936
    %10 = vst.msk [vmem:[#allocation0] sm:$0x1] %vm9, %v8
    %s11 = scalar_lea.vmem %s0, 6
    %v12 = vld [vmem:[%s11] sm:$0x1]
    %13 = vrot.lane.b32.xlu0 %v12, 30
    %v14 = vpop.permute.xlu0 %13
    %vm15 = vcmask 285936
    %16 = vst.msk [vmem:[#allocation0] sm:$0x1] %vm15, %v14
    %s17 = scalar_lea.vmem %s0, 5
    %v18 = vld [vmem:[%s17] sm:$0x1]
    %19 = vrot.lane.b32.xlu0 %v18, 25
    %v20 = vpop.permute.xlu0 %19
    %vm21 = vcmask 244936
    %22 = vst.msk [vmem:[#allocation0] sm:$0x1] %vm21, %v20
    %s23 = scalar_lea.vmem %s0, 4
    %v24 = vld [vmem:[%s23] sm:$0x1]
    %25 = vrot.lane.b32.xlu0 %v24, 20
    %v26 = vpop.permute.xlu0 %25
    %vm27 = vcmask 203936
    %28 = vst.msk [vmem:[#allocation0] sm:$0x1] %vm27, %v26
    %s29 = scalar_lea.vmem %s0, 3
    %v30 = vld [vmem:[%s29] sm:$0x1]
    %31 = vrot.lane.b32.xlu0 %v30, 15
    %v32 = vpop.permute.xlu0 %31
    %vm33 = vcmask 162936
    %34 = vst.msk [vmem:[#allocation0] sm:$0x1] %vm33, %v32
    %s35 = scalar_lea.vmem %s0, 2
    %v36 = vld [vmem:[%s35] sm:$0x1]
    %37 = vrot.lane.b32.xlu0 %v36, 10
    %v38 = vpop.permute.xlu0 %37
    %vm39 = vcmask 121936
    %40 = vst.msk [vmem:[#allocation0] sm:$0x1] %vm39, %v38
    %s41 = scalar_lea.vmem %s0, 1
    %v42 = vld [vmem:[%s41] sm:$0x1]
    %43 = vrot.lane.b32.xlu0 %v42, 5
    %v44 = vpop.permute.xlu0 %43
    %vm45 = vcmask 80936
    %46 = vst.msk [vmem:[#allocation0] sm:$0x1] %vm45, %v44
    %s48 = sshllo.u32 0, 1
    %v50 = vld [vmem:[#allocation0] sm:%s48]
    %s51 = sshllo.u32 0, 1
    %52 = vst [vmem:[%s1] sm:%s51] %v50

// kernel: toy_model_forward.1
$region0: #{toy_model_forward.1}
  #allocation0 [shape = 'u32[]', space=smem, size = 0x4, offset = 0x4, fixed_abs, tag = 'smem constant byte address 0x4 - core index']
  #allocation1 [shape = 'u32[144,128]{1,0:T(1,128)}', space=vmem, size = 0x12000, scoped, tag = 'internal scratch']
  %s0 = inlined_call_operand.vmem [shape: f32[16,80], index: 0, kind: input, shape index: {}]
  %s1 = inlined_call_operand.vmem [shape: bf16[80,80], index: 1, kind: input, shape index: {}]
  %s2 = inlined_call_operand.vmem [shape: f32[1,80], index: 2, kind: input, shape index: {}]
  %s3 = inlined_call_operand.vmem [shape: bf16[80,40], index: 3, kind: input, shape index: {}]
  %s4 = inlined_call_operand.vmem [shape: f32[1,40], index: 4, kind: input, shape index: {}]
  %s5 = inlined_call_operand.vmem [shape: f32[16,40], index: 5, kind: output, shape index: {}]
  %s6 = sld [smem:[#allocation0]]
  $region30: #{toy_model_forward.1} parent=0
    _
  %s8 = ssub.s32 1, %s6
  %s9 = scalar_select 0, %s8, %s6
  // Predicated region
  $region2: #{toy_model_forward.1} parent=0 // pred_check
    _
  $region3: #{toy_model_forward.1} parent=0 // pred_check_branch
    %11 = sbr.rel (0) target = $region5
  $region4: #{toy_model_forward.1} parent=0 // pred_region
    _
  $region5: #{toy_model_forward.1} parent=0 // pred_fallthru
    _
  // Predicated region
  $region6: #{toy_model_forward.1} parent=0 // pred_check
    _
  $region7: #{toy_model_forward.1} parent=0 // pred_check_branch
    %13 = sbr.rel (0) target = $region9
  $region8: #{toy_model_forward.1} parent=0 // pred_region
    _
  $region9: #{toy_model_forward.1} parent=0 // pred_fallthru
    _
  // Predicated region
  $region10: #{toy_model_forward.1} parent=0 // pred_check
    _
  $region11: #{toy_model_forward.1} parent=0 // pred_check_branch
    %15 = sbr.rel (0) target = $region13
  $region12: #{toy_model_forward.1} parent=0 // pred_region
    _
  $region13: #{toy_model_forward.1} parent=0 // pred_fallthru
    _
  // Predicated region
  $region14: #{toy_model_forward.1} parent=0 // pred_check
    _
  $region15: #{toy_model_forward.1} parent=0 // pred_check_branch
    %17 = sbr.rel (0) target = $region17
  $region16: #{toy_model_forward.1} parent=0 // pred_region
    _
  $region17: #{toy_model_forward.1} parent=0 // pred_fallthru
    _
  // Predicated region
  $region18: #{toy_model_forward.1} parent=0 // pred_check
    _
  $region19: #{toy_model_forward.1} parent=0 // pred_check_branch
    %19 = sbr.rel (0) target = $region21
  $region20: #{toy_model_forward.1} parent=0 // pred_region
    _
  $region21: #{toy_model_forward.1} parent=0 // pred_fallthru
    _
  %v21 = vld [vmem:[%s0] sm:$0xff]
  %v22 = vld [vmem:[%s0 + $0x8] sm:$0xff]
  %v23 = vpack.c.bf16 %v22, %v21
  %v24 = vld [vmem:[%s1] sm:$0xf]
  %v25 = vld [vmem:[%s1 + $0x4] sm:$0xf]
  %v26 = vld [vmem:[%s1 + $0x8] sm:$0xf]
  %v27 = vld [vmem:[%s1 + $0xc] sm:$0xf]
  %v28 = vld [vmem:[%s1 + $0x10] sm:$0xf]
  %v29 = vld [vmem:[%s1 + $0x14] sm:$0xf]
  %v30 = vld [vmem:[%s1 + $0x18] sm:$0xf]
  %v31 = vld [vmem:[%s1 + $0x1c] sm:$0xf]
  %v32 = vld [vmem:[%s1 + $0x20] sm:$0xf]
  %v33 = vld [vmem:[%s1 + $0x24] sm:$0xf]
  %v34 = vld [vmem:[%s2] sm:$0x1]
  %v36 = vlaneseq
  %v37 = vshrl.u32 %v36, 7
  %v38 = vsub.s32 0, %v37
  %v39 = vrot.slane %v34, %v38
  %v51 = vunpack.c.l.b16 %v24
  %v52 = vunpack.c.l.b16 %v25
  %v53 = vunpack.c.l.b16 %v26
  %v54 = vunpack.c.l.b16 %v27
  %v55 = vunpack.c.l.b16 %v28
  %v56 = vunpack.c.l.b16 %v29
  %v57 = vunpack.c.l.b16 %v30
  %v58 = vunpack.c.l.b16 %v31
  %v59 = vunpack.c.l.b16 %v32
  %v60 = vunpack.c.l.b16 %v33
  %v61 = vpack.c.b16 %v52, %v51
  %v62 = vpack.c.b16 %v54, %v53
  %v63 = vpack.c.b16 %v56, %v55
  %v64 = vpack.c.b16 %v58, %v57
  %v65 = vpack.c.b16 %v60, %v59
  %vm71 = vcmask 654336
  %v73 = vsel %vm71, %v23, 0
  %75 = vmatprep.subr.bf16.mxu0 0
  %76 = vmatpush1.bf16.msra.mxu0 %v61
  %77 = vmatprep.subr.bf16.mxu0 0
  %78 = vmatpush1.bf16.msra.mxu0 %v62
  %79 = vmatprep.subr.bf16.mxu0 0
  %80 = vmatpush1.bf16.msra.mxu0 %v63
  %81 = vmatprep.subr.bf16.mxu0 0
  %82 = vmatpush1.bf16.msra.mxu0 %v64
  %83 = vmatprep.subr.bf16.mxu0 0
  %84 = vmatpush1.bf16.msra.mxu0 %v65
  %85 = vmatprep.subr.bf16.mxu0 0
  %86 = vmatpush1.bf16.msra.mxu0 0
  %87 = vmatprep.subr.bf16.mxu0 0
  %88 = vmatpush1.bf16.msra.mxu0 0
  %89 = vmatprep.subr.bf16.mxu0 0
  %90 = vmatpush1.bf16.msra.mxu0 0
  %91 = vmatprep.subr.bf16.mxu0 0
  %92 = vmatpush1.bf16.msra.mxu0 0
  %93 = vmatprep.subr.bf16.mxu0 0
  %94 = vmatpush1.bf16.msra.mxu0 0
  %95 = vmatprep.subr.bf16.mxu0 0
  %96 = vmatpush1.bf16.msra.mxu0 0
  %97 = vmatprep.subr.bf16.mxu0 0
  %98 = vmatpush1.bf16.msra.mxu0 0
  %99 = vmatprep.subr.bf16.mxu0 0
  %100 = vmatpush1.bf16.msra.mxu0 0
  %101 = vmatprep.subr.bf16.mxu0 0
  %102 = vmatpush1.bf16.msra.mxu0 0
  %103 = vmatprep.subr.bf16.mxu0 0
  %104 = vmatpush1.bf16.msra.mxu0 0
  %105 = vmatprep.subr.bf16.mxu0 0
  %106 = vmatpush1.bf16.msra.mxu0 0
  %107 = vmatprep.mubr.bf16.mxu0 0
  %108 = vmatmul.mubr.bf16.gmra.mrb[0].mxu0 %v73
  %v109 = vpop.f32.mrb[0].mxu0
  %v110 = vadd.f32 %v39, %v109
  %v111 = vpop.f32.mrb[0].mxu0
  %v112 = vpop.f32.mrb[0].mxu0
  %v113 = vadd.f32 %v39, %v112
  %v114 = vpop.f32.mrb[0].mxu0
  %115 = vdwg.mxu0
  %v116 = vmax.f32 %v110, 0.0
  %v117 = vmax.f32 %v113, 0.0
  %v118 = vpack.c.bf16 %v117, %v116
  %v119 = vld [vmem:[%s3] sm:$0xf]
  %v120 = vld [vmem:[%s3 + $0x4] sm:$0xf]
  %v121 = vld [vmem:[%s3 + $0x8] sm:$0xf]
  %v122 = vld [vmem:[%s3 + $0xc] sm:$0xf]
  %v123 = vld [vmem:[%s3 + $0x10] sm:$0xf]
  %v124 = vld [vmem:[%s3 + $0x14] sm:$0xf]
  %v125 = vld [vmem:[%s3 + $0x18] sm:$0xf]
  %v126 = vld [vmem:[%s3 + $0x1c] sm:$0xf]
  %v127 = vld [vmem:[%s3 + $0x20] sm:$0xf]
  %v128 = vld [vmem:[%s3 + $0x24] sm:$0xf]
  %v129 = vld [vmem:[%s4] sm:$0x1]
  %v131 = vlaneseq
  %v132 = vshrl.u32 %v131, 7
  %v133 = vsub.s32 0, %v132
  %v134 = vrot.slane %v129, %v133
  %v146 = vunpack.c.l.b16 %v119
  %v147 = vunpack.c.l.b16 %v120
  %v148 = vunpack.c.l.b16 %v121
  %v149 = vunpack.c.l.b16 %v122
  %v150 = vunpack.c.l.b16 %v123
  %v151 = vunpack.c.l.b16 %v124
  %v152 = vunpack.c.l.b16 %v125
  %v153 = vunpack.c.l.b16 %v126
  %v154 = vunpack.c.l.b16 %v127
  %v155 = vunpack.c.l.b16 %v128
  %v156 = vpack.c.b16 %v147, %v146
  %v157 = vpack.c.b16 %v149, %v148
  %v158 = vpack.c.b16 %v151, %v150
  %v159 = vpack.c.b16 %v153, %v152
  %v160 = vpack.c.b16 %v155, %v154
  %v167 = vsel %vm71, %v118, 0
  %169 = vmatprep.subr.bf16.mxu0 0
  %170 = vmatpush1.bf16.msra.mxu0 %v156
  %171 = vmatprep.subr.bf16.mxu0 0
  %172 = vmatpush1.bf16.msra.mxu0 %v157
  %173 = vmatprep.subr.bf16.mxu0 0
  %174 = vmatpush1.bf16.msra.mxu0 %v158
  %175 = vmatprep.subr.bf16.mxu0 0
  %176 = vmatpush1.bf16.msra.mxu0 %v159
  %177 = vmatprep.subr.bf16.mxu0 0
  %178 = vmatpush1.bf16.msra.mxu0 %v160
  %179 = vmatprep.subr.bf16.mxu0 0
  %180 = vmatpush1.bf16.msra.mxu0 0
  %181 = vmatprep.subr.bf16.mxu0 0
  %182 = vmatpush1.bf16.msra.mxu0 0
  %183 = vmatprep.subr.bf16.mxu0 0
  %184 = vmatpush1.bf16.msra.mxu0 0
  %185 = vmatprep.subr.bf16.mxu0 0
  %186 = vmatpush1.bf16.msra.mxu0 0
  %187 = vmatprep.subr.bf16.mxu0 0
  %188 = vmatpush1.bf16.msra.mxu0 0
  %189 = vmatprep.subr.bf16.mxu0 0
  %190 = vmatpush1.bf16.msra.mxu0 0
  %191 = vmatprep.subr.bf16.mxu0 0
  %192 = vmatpush1.bf16.msra.mxu0 0
  %193 = vmatprep.subr.bf16.mxu0 0
  %194 = vmatpush1.bf16.msra.mxu0 0
  %195 = vmatprep.subr.bf16.mxu0 0
  %196 = vmatpush1.bf16.msra.mxu0 0
  %197 = vmatprep.subr.bf16.mxu0 0
  %198 = vmatpush1.bf16.msra.mxu0 0
  %199 = vmatprep.subr.bf16.mxu0 0
  %200 = vmatpush1.bf16.msra.mxu0 0
  %201 = vmatprep.mubr.bf16.mxu0 0
  %202 = vmatmul.mubr.bf16.gmra.mrb[0].mxu0 %v167
  %v203 = vpop.f32.mrb[0].mxu0
  %v204 = vadd.f32 %v134, %v203
  %v205 = vpop.f32.mrb[0].mxu0
  %v206 = vpop.f32.mrb[0].mxu0
  %v207 = vadd.f32 %v134, %v206
  %v208 = vpop.f32.mrb[0].mxu0
  %209 = vdwg.mxu0
  %vm210 = vcmask 326656
  %211 = vst.msk [vmem:[%s5] sm:$0xff] %vm210, %v204
  %212 = vst.msk [vmem:[%s5 + $0x8] sm:$0xff] %vm210, %v207
  // Predicated region
  $region22: #{toy_model_forward.1} parent=0 // pred_check
    _
  $region23: #{toy_model_forward.1} parent=0 // pred_check_branch
    %214 = sbr.rel (0) target = $region25
  $region24: #{toy_model_forward.1} parent=0 // pred_region
    _
  $region25: #{toy_model_forward.1} parent=0 // pred_fallthru
    _
  // Predicated region
  $region26: #{toy_model_forward.1} parent=0 // pred_check
    _
  $region27: #{toy_model_forward.1} parent=0 // pred_check_branch
    %216 = sbr.rel (0) target = $region29
  $region28: #{toy_model_forward.1} parent=0 // pred_region
    _
  $region29: #{toy_model_forward.1} parent=0 // pred_fallthru
    _

</llo_original>
